<compile_context>
chip_gen: v7x
topology: tpu7x:2x2x1
jax: 0.10.0
libtpu: 0.0.40
codegen_flags: <defaults>
</compile_context>

<pallas_src>
import functools

import jax
import jax.numpy as jnp
from jax import lax
from jax.experimental import pallas as pl
from jax.experimental.pallas import tpu as pltpu


def _round_up(x, m):
    return (x + m - 1) // m * m


def _diff_loss_kernel(x1_ref, x2_ref, o_ref,
                      sum1, sum2, sq1, sq2, cross,
                      *, d_true, tile_d, needs_mask):
    k = pl.program_id(0)

    @pl.when(k == 0)
    def _init():
        sum1[...] = jnp.zeros_like(sum1)
        sum2[...] = jnp.zeros_like(sum2)
        sq1[...] = jnp.zeros_like(sq1)
        sq2[...] = jnp.zeros_like(sq2)
        cross[...] = jnp.zeros_like(cross)

    # (B, TILE_D) tiles in native dtype.
    x1 = x1_ref[...]
    x2 = x2_ref[...]

    if needs_mask:
        # Last grid step reads a block that extends past D; those columns hold
        # unspecified data, so zero them before they touch any accumulator.
        b = x1.shape[0]
        col = lax.broadcasted_iota(jnp.int32, (b, tile_d), 1)
        valid = col < (d_true - k * tile_d)
        x1 = jnp.where(valid, x1, jnp.zeros_like(x1))
        x2 = jnp.where(valid, x2, jnp.zeros_like(x2))

    x1f = x1.astype(jnp.float32)
    x2f = x2.astype(jnp.float32)

    sum1[...] += jnp.sum(x1f, axis=1, keepdims=True)
    sum2[...] += jnp.sum(x2f, axis=1, keepdims=True)
    sq1[...] += jnp.sum(x1f * x1f, axis=1, keepdims=True)
    sq2[...] += jnp.sum(x2f * x2f, axis=1, keepdims=True)
    # Contract directly on the D axis of both operands -> no transposed copy.
    cross[...] += lax.dot_general(
        x1, x2,
        dimension_numbers=(((1,), (1,)), ((), ())),
        preferred_element_type=jnp.float32)

    @pl.when(k == pl.num_programs(0) - 1)
    def _finalize():
        d = float(d_true)
        m1 = sum1[...] * (1.0 / d)                     # (B, 1) row means
        m2 = sum2[...] * (1.0 / d)
        # centered sum-of-squares:  ||x - m||^2 = sum(x^2) - D*m^2
        v1 = jnp.maximum(sq1[...] - d * m1 * m1, 0.0)
        v2 = jnp.maximum(sq2[...] - d * m2 * m2, 0.0)
        r1 = 1.0 / (jnp.sqrt(v1) + 1e-6)
        r2 = 1.0 / (jnp.sqrt(v2) + 1e-6)
        # (B, B) outer products via a K=1 contraction (avoids any (1, B)
        # transpose / relayout of the column vectors).
        mean_outer = lax.dot_general(
            m1, m2, dimension_numbers=(((1,), (1,)), ((), ())),
            preferred_element_type=jnp.float32)
        scale_outer = lax.dot_general(
            r1, r2, dimension_numbers=(((1,), (1,)), ((), ())),
            preferred_element_type=jnp.float32)
        # centered + normalized Gram, then mean of squares * 1e4
        g = (cross[...] - d * mean_outer) * scale_outer
        o_ref[0, 0] = jnp.mean(g * g) * 10000.0


def _choose_tile_d(b, d_arr, itemsize, vmem_budget_bytes=12 * 1024 * 1024):
    """Largest lane-dense TILE_D whose double-buffered working set fits budget."""
    b_pad = max(_round_up(b, 8), 8)          # sublane padding of each tile
    per_col = 4 * b_pad * itemsize           # 2 inputs x 2 pipeline buffers
    tile = (vmem_budget_bytes // per_col) // 128 * 128
    tile = max(tile, 128)
    tile = min(tile, (d_arr // 128) * 128)   # block must not exceed array dim
    return int(tile)


def diff_loss_norm(input1, input2):
    """Pallas equivalent of DiffLoss_norm.forward. Returns a float32 scalar."""
    b = input1.shape[0]
    x1 = input1.reshape(b, -1)
    x2 = input2.reshape(b, -1)
    assert x1.shape == x2.shape, "input1/input2 must flatten to the same (B, D)"
    d = x1.shape[1]

    d_arr = d
    if d < 128:
        # Tiny feature dim: pad up to one lane-dense tile.  Zero columns do
        # not perturb any accumulator; the true D is used for the means.
        d_arr = 128
        pad = ((0, 0), (0, d_arr - d))
        x1 = jnp.pad(x1, pad)
        x2 = jnp.pad(x2, pad)

    tile_d = _choose_tile_d(b, d_arr, x1.dtype.itemsize)
    num_tiles = pl.cdiv(d_arr, tile_d)
    needs_mask = (d_arr % tile_d) != 0

    kernel = functools.partial(_diff_loss_kernel, d_true=d, tile_d=tile_d,
                               needs_mask=needs_mask)

    out = pl.pallas_call(
        kernel,
        out_shape=jax.ShapeDtypeStruct((1, 1), jnp.float32),
        grid_spec=pltpu.PrefetchScalarGridSpec(
            num_scalar_prefetch=0,
            grid=(num_tiles,),
            in_specs=[
                pl.BlockSpec((b, tile_d), lambda k: (0, k)),
                pl.BlockSpec((b, tile_d), lambda k: (0, k)),
            ],
            out_specs=pl.BlockSpec((1, 1), lambda k: (0, 0),
                                   memory_space=pltpu.MemorySpace.SMEM),
            scratch_shapes=[
                pltpu.VMEM((b, 1), jnp.float32),   # sum(x1)   per row
                pltpu.VMEM((b, 1), jnp.float32),   # sum(x2)   per row
                pltpu.VMEM((b, 1), jnp.float32),   # sum(x1^2) per row
                pltpu.VMEM((b, 1), jnp.float32),   # sum(x2^2) per row
                pltpu.VMEM((b, b), jnp.float32),   # raw cross dot x1 @ x2^T
            ]),
        compiler_params=pltpu.CompilerParams(
            dimension_semantics=("arbitrary",),
            vmem_limit_bytes=48 * 1024 * 1024),
    )(x1, x2)
    return out[0, 0]


def _reference(input1, input2):
    b = input1.shape[0]
    x1 = input1.reshape(b, -1).astype(jnp.float32)
    x2 = input2.reshape(b, -1).astype(jnp.float32)
    x1 = x1 - jnp.mean(x1, axis=1, keepdims=True)
    x2 = x2 - jnp.mean(x2, axis=1, keepdims=True)
    x1 = x1 / (jnp.linalg.norm(x1, axis=1, keepdims=True) + 1e-6)
    x2 = x2 / (jnp.linalg.norm(x2, axis=1, keepdims=True) + 1e-6)
    return jnp.mean((x1 @ x2.T) ** 2) * 10000.0


if __name__ == "__main__":
    key = jax.random.PRNGKey(0)
    k1, k2, k3, k4 = jax.random.split(key, 4)

    loss_fn = jax.jit(diff_loss_norm)

    # NCHW inputs, as the PyTorch module would typically receive (B, C, H, W).
    x1 = jax.random.normal(k1, (2, 4, 16, 16), dtype=jnp.float32)
    x2 = jax.random.normal(k2, (2, 4, 16, 16), dtype=jnp.float32)
    loss = loss_fn(x1, x2)
    jax.block_until_ready(loss)
    ref = _reference(x1, x2)
    assert jnp.allclose(loss, ref, rtol=1e-3, atol=1e-3), (loss, ref)

    # A shape whose flattened D (= 429) is not tile-aligned exercises the
    # in-kernel masking of the partial last tile.
    y1 = jax.random.normal(k3, (2, 3, 11, 13), dtype=jnp.float32)
    y2 = jax.random.normal(k4, (2, 3, 11, 13), dtype=jnp.float32)
    loss2 = loss_fn(y1, y2)
    jax.block_until_ready(loss2)
    ref2 = _reference(y1, y2)
    assert jnp.allclose(loss2, ref2, rtol=1e-3, atol=1e-3), (loss2, ref2)

    print("KERNEL_OK")
</pallas_src>

<mosaic_0001>
module attributes {stable_mosaic.version = 11 : i64} {
  func.func @_diff_loss_kernel(%arg0: i32, %arg1: memref<2x1024xf32, #tpu.memory_space<vmem>>, %arg2: memref<2x1024xf32, #tpu.memory_space<vmem>>, %arg3: memref<1x1xf32, #tpu.memory_space<smem>>, %arg4: memref<2x1xf32, #tpu.memory_space<vmem>>, %arg5: memref<2x1xf32, #tpu.memory_space<vmem>>, %arg6: memref<2x1xf32, #tpu.memory_space<vmem>>, %arg7: memref<2x1xf32, #tpu.memory_space<vmem>>, %arg8: memref<2x2xf32, #tpu.memory_space<vmem>>) attributes {dimension_semantics = [#tpu.dimension_semantics<arbitrary>], iteration_bounds = array<i64: 1>, scalar_prefetch = 0 : i64, scratch_operands = 5 : i64, tpu.core_type = #tpu.core_type<tc>, window_params = [{transform_indices = @transform_0, window_bounds = array<i64: 2, 1024>}, {transform_indices = @transform_1, window_bounds = array<i64: 2, 1024>}, {transform_indices = @transform_2, window_bounds = array<i64: 1, 1>}]} {
    %c0_i32 = arith.constant 0 : i32
    %0 = arith.cmpi eq, %arg0, %c0_i32 : i32
    %1 = arith.extui %0 : i1 to i32
    %c0_i32_0 = arith.constant 0 : i32
    %2 = arith.cmpi ne, %1, %c0_i32_0 : i32
    scf.if %2 {
      %cst_30 = arith.constant 0.000000e+00 : f32
      %34 = vector.broadcast %cst_30 : f32 to vector<2x1xf32>
      %c0_31 = arith.constant 0 : index
      %c0_32 = arith.constant 0 : index
      %35 = vector.load %arg4[%c0_31, %c0_32] : memref<2x1xf32, #tpu.memory_space<vmem>>, vector<2x1xf32>
      tpu.vector_store %arg4[%c0_31, %c0_32], %34 {strides = array<i32>} : memref<2x1xf32, #tpu.memory_space<vmem>>, vector<2x1xf32>,
      %cst_33 = arith.constant 0.000000e+00 : f32
      %36 = vector.broadcast %cst_33 : f32 to vector<2x1xf32>
      %c0_34 = arith.constant 0 : index
      %c0_35 = arith.constant 0 : index
      %37 = vector.load %arg5[%c0_34, %c0_35] : memref<2x1xf32, #tpu.memory_space<vmem>>, vector<2x1xf32>
      tpu.vector_store %arg5[%c0_34, %c0_35], %36 {strides = array<i32>} : memref<2x1xf32, #tpu.memory_space<vmem>>, vector<2x1xf32>,
      %cst_36 = arith.constant 0.000000e+00 : f32
      %38 = vector.broadcast %cst_36 : f32 to vector<2x1xf32>
      %c0_37 = arith.constant 0 : index
      %c0_38 = arith.constant 0 : index
      %39 = vector.load %arg6[%c0_37, %c0_38] : memref<2x1xf32, #tpu.memory_space<vmem>>, vector<2x1xf32>
      tpu.vector_store %arg6[%c0_37, %c0_38], %38 {strides = array<i32>} : memref<2x1xf32, #tpu.memory_space<vmem>>, vector<2x1xf32>,
      %cst_39 = arith.constant 0.000000e+00 : f32
      %40 = vector.broadcast %cst_39 : f32 to vector<2x1xf32>
      %c0_40 = arith.constant 0 : index
      %c0_41 = arith.constant 0 : index
      %41 = vector.load %arg7[%c0_40, %c0_41] : memref<2x1xf32, #tpu.memory_space<vmem>>, vector<2x1xf32>
      tpu.vector_store %arg7[%c0_40, %c0_41], %40 {strides = array<i32>} : memref<2x1xf32, #tpu.memory_space<vmem>>, vector<2x1xf32>,
      %cst_42 = arith.constant 0.000000e+00 : f32
      %42 = vector.broadcast %cst_42 : f32 to vector<2x2xf32>
      %c0_43 = arith.constant 0 : index
      %c0_44 = arith.constant 0 : index
      %43 = vector.load %arg8[%c0_43, %c0_44] : memref<2x2xf32, #tpu.memory_space<vmem>>, vector<2x2xf32>
      tpu.vector_store %arg8[%c0_43, %c0_44], %42 {strides = array<i32>} : memref<2x2xf32, #tpu.memory_space<vmem>>, vector<2x2xf32>,
    } else {
    }
    %c0 = arith.constant 0 : index
    %c0_1 = arith.constant 0 : index
    %3 = vector.load %arg1[%c0, %c0_1] : memref<2x1024xf32, #tpu.memory_space<vmem>>, vector<2x1024xf32>
    %c0_2 = arith.constant 0 : index
    %c0_3 = arith.constant 0 : index
    %4 = vector.load %arg2[%c0_2, %c0_3] : memref<2x1024xf32, #tpu.memory_space<vmem>>, vector<2x1024xf32>
    %c0_4 = arith.constant 0 : index
    %c0_5 = arith.constant 0 : index
    %5 = vector.load %arg4[%c0_4, %c0_5] : memref<2x1xf32, #tpu.memory_space<vmem>>, vector<2x1xf32>
    %cst = arith.constant dense<0.000000e+00> : vector<2xf32>
    %6 = vector.multi_reduction <add>, %3, %cst [1] : vector<2x1024xf32> to vector<2xf32>
    %7 = vector.shape_cast %6 : vector<2xf32> to vector<2x1xf32>
    %8 = arith.addf %5, %7 : vector<2x1xf32>
    %c0_6 = arith.constant 0 : index
    %c0_7 = arith.constant 0 : index
    %9 = vector.load %arg4[%c0_6, %c0_7] : memref<2x1xf32, #tpu.memory_space<vmem>>, vector<2x1xf32>
    tpu.vector_store %arg4[%c0_6, %c0_7], %8 {strides = array<i32>} : memref<2x1xf32, #tpu.memory_space<vmem>>, vector<2x1xf32>,
    %c0_8 = arith.constant 0 : index
    %c0_9 = arith.constant 0 : index
    %10 = vector.load %arg5[%c0_8, %c0_9] : memref<2x1xf32, #tpu.memory_space<vmem>>, vector<2x1xf32>
    %cst_10 = arith.constant dense<0.000000e+00> : vector<2xf32>
    %11 = vector.multi_reduction <add>, %4, %cst_10 [1] : vector<2x1024xf32> to vector<2xf32>
    %12 = vector.shape_cast %11 : vector<2xf32> to vector<2x1xf32>
    %13 = arith.addf %10, %12 : vector<2x1xf32>
    %c0_11 = arith.constant 0 : index
    %c0_12 = arith.constant 0 : index
    %14 = vector.load %arg5[%c0_11, %c0_12] : memref<2x1xf32, #tpu.memory_space<vmem>>, vector<2x1xf32>
    tpu.vector_store %arg5[%c0_11, %c0_12], %13 {strides = array<i32>} : memref<2x1xf32, #tpu.memory_space<vmem>>, vector<2x1xf32>,
    %c0_13 = arith.constant 0 : index
    %c0_14 = arith.constant 0 : index
    %15 = vector.load %arg6[%c0_13, %c0_14] : memref<2x1xf32, #tpu.memory_space<vmem>>, vector<2x1xf32>
    %16 = arith.mulf %3, %3 : vector<2x1024xf32>
    %cst_15 = arith.constant dense<0.000000e+00> : vector<2xf32>
    %17 = vector.multi_reduction <add>, %16, %cst_15 [1] : vector<2x1024xf32> to vector<2xf32>
    %18 = vector.shape_cast %17 : vector<2xf32> to vector<2x1xf32>
    %19 = arith.addf %15, %18 : vector<2x1xf32>
    %c0_16 = arith.constant 0 : index
    %c0_17 = arith.constant 0 : index
    %20 = vector.load %arg6[%c0_16, %c0_17] : memref<2x1xf32, #tpu.memory_space<vmem>>, vector<2x1xf32>
    tpu.vector_store %arg6[%c0_16, %c0_17], %19 {strides = array<i32>} : memref<2x1xf32, #tpu.memory_space<vmem>>, vector<2x1xf32>,
    %c0_18 = arith.constant 0 : index
    %c0_19 = arith.constant 0 : index
    %21 = vector.load %arg7[%c0_18, %c0_19] : memref<2x1xf32, #tpu.memory_space<vmem>>, vector<2x1xf32>
    %22 = arith.mulf %4, %4 : vector<2x1024xf32>
    %cst_20 = arith.constant dense<0.000000e+00> : vector<2xf32>
    %23 = vector.multi_reduction <add>, %22, %cst_20 [1] : vector<2x1024xf32> to vector<2xf32>
    %24 = vector.shape_cast %23 : vector<2xf32> to vector<2x1xf32>
    %25 = arith.addf %21, %24 : vector<2x1xf32>
    %c0_21 = arith.constant 0 : index
    %c0_22 = arith.constant 0 : index
    %26 = vector.load %arg7[%c0_21, %c0_22] : memref<2x1xf32, #tpu.memory_space<vmem>>, vector<2x1xf32>
    tpu.vector_store %arg7[%c0_21, %c0_22], %25 {strides = array<i32>} : memref<2x1xf32, #tpu.memory_space<vmem>>, vector<2x1xf32>,
    %c0_23 = arith.constant 0 : index
    %c0_24 = arith.constant 0 : index
    %27 = vector.load %arg8[%c0_23, %c0_24] : memref<2x2xf32, #tpu.memory_space<vmem>>, vector<2x2xf32>
    %cst_25 = arith.constant dense<0.000000e+00> : vector<2x2xf32>
    %28 = tpu.matmul %3, %4, %cst_25 {dimension_numbers = #tpu.dot_dimension_numbers<[1], [1], [0], [0], [0, 0, 1, 0], [], []>} : vector<2x1024xf32>, vector<2x1024xf32>, vector<2x2xf32> -> vector<2x2xf32>
    %29 = arith.addf %27, %28 : vector<2x2xf32>
    %c0_26 = arith.constant 0 : index
    %c0_27 = arith.constant 0 : index
    %30 = vector.load %arg8[%c0_26, %c0_27] : memref<2x2xf32, #tpu.memory_space<vmem>>, vector<2x2xf32>
    tpu.vector_store %arg8[%c0_26, %c0_27], %29 {strides = array<i32>} : memref<2x2xf32, #tpu.memory_space<vmem>>, vector<2x2xf32>,
    %c0_i32_28 = arith.constant 0 : i32
    %31 = arith.cmpi eq, %arg0, %c0_i32_28 : i32
    %32 = arith.extui %31 : i1 to i32
    %c0_i32_29 = arith.constant 0 : i32
    %33 = arith.cmpi ne, %32, %c0_i32_29 : i32
    scf.if %33 {
      %c0_30 = arith.constant 0 : index
      %c0_31 = arith.constant 0 : index
      %34 = vector.load %arg4[%c0_30, %c0_31] : memref<2x1xf32, #tpu.memory_space<vmem>>, vector<2x1xf32>
      %cst_32 = arith.constant 9.765625E-4 : f32
      %35 = vector.broadcast %cst_32 : f32 to vector<2x1xf32>
      %36 = arith.mulf %34, %35 : vector<2x1xf32>
      %c0_33 = arith.constant 0 : index
      %c0_34 = arith.constant 0 : index
      %37 = vector.load %arg5[%c0_33, %c0_34] : memref<2x1xf32, #tpu.memory_space<vmem>>, vector<2x1xf32>
      %cst_35 = arith.constant 9.765625E-4 : f32
      %38 = vector.broadcast %cst_35 : f32 to vector<2x1xf32>
      %39 = arith.mulf %37, %38 : vector<2x1xf32>
      %c0_36 = arith.constant 0 : index
      %c0_37 = arith.constant 0 : index
      %40 = vector.load %arg6[%c0_36, %c0_37] : memref<2x1xf32, #tpu.memory_space<vmem>>, vector<2x1xf32>
      %cst_38 = arith.constant 1.024000e+03 : f32
      %41 = vector.broadcast %cst_38 : f32 to vector<2x1xf32>
      %42 = arith.mulf %41, %36 : vector<2x1xf32>
      %43 = arith.mulf %42, %36 : vector<2x1xf32>
      %44 = arith.subf %40, %43 : vector<2x1xf32>
      %cst_39 = arith.constant 0.000000e+00 : f32
      %45 = vector.broadcast %cst_39 : f32 to vector<2x1xf32>
      %46 = arith.maximumf %44, %45 : vector<2x1xf32>
      %c0_40 = arith.constant 0 : index
      %c0_41 = arith.constant 0 : index
      %47 = vector.load %arg7[%c0_40, %c0_41] : memref<2x1xf32, #tpu.memory_space<vmem>>, vector<2x1xf32>
      %cst_42 = arith.constant 1.024000e+03 : f32
      %48 = vector.broadcast %cst_42 : f32 to vector<2x1xf32>
      %49 = arith.mulf %48, %39 : vector<2x1xf32>
      %50 = arith.mulf %49, %39 : vector<2x1xf32>
      %51 = arith.subf %47, %50 : vector<2x1xf32>
      %cst_43 = arith.constant 0.000000e+00 : f32
      %52 = vector.broadcast %cst_43 : f32 to vector<2x1xf32>
      %53 = arith.maximumf %51, %52 : vector<2x1xf32>
      %54 = math.sqrt %46 : vector<2x1xf32>
      %cst_44 = arith.constant 9.99999997E-7 : f32
      %55 = vector.broadcast %cst_44 : f32 to vector<2x1xf32>
      %56 = arith.addf %54, %55 : vector<2x1xf32>
      %cst_45 = arith.constant 1.000000e+00 : f32
      %57 = vector.broadcast %cst_45 : f32 to vector<2x1xf32>
      %58 = arith.divf %57, %56 : vector<2x1xf32>
      %59 = math.sqrt %53 : vector<2x1xf32>
      %cst_46 = arith.constant 9.99999997E-7 : f32
      %60 = vector.broadcast %cst_46 : f32 to vector<2x1xf32>
      %61 = arith.addf %59, %60 : vector<2x1xf32>
      %cst_47 = arith.constant 1.000000e+00 : f32
      %62 = vector.broadcast %cst_47 : f32 to vector<2x1xf32>
      %63 = arith.divf %62, %61 : vector<2x1xf32>
      %cst_48 = arith.constant dense<0.000000e+00> : vector<2x2xf32>
      %64 = tpu.matmul %36, %39, %cst_48 {dimension_numbers = #tpu.dot_dimension_numbers<[1], [1], [0], [0], [0, 0, 1, 0], [], []>} : vector<2x1xf32>, vector<2x1xf32>, vector<2x2xf32> -> vector<2x2xf32>
      %cst_49 = arith.constant dense<0.000000e+00> : vector<2x2xf32>
      %65 = tpu.matmul %58, %63, %cst_49 {dimension_numbers = #tpu.dot_dimension_numbers<[1], [1], [0], [0], [0, 0, 1, 0], [], []>} : vector<2x1xf32>, vector<2x1xf32>, vector<2x2xf32> -> vector<2x2xf32>
      %c0_50 = arith.constant 0 : index
      %c0_51 = arith.constant 0 : index
      %66 = vector.load %arg8[%c0_50, %c0_51] : memref<2x2xf32, #tpu.memory_space<vmem>>, vector<2x2xf32>
      %cst_52 = arith.constant 1.024000e+03 : f32
      %67 = vector.broadcast %cst_52 : f32 to vector<2x2xf32>
      %68 = arith.mulf %67, %64 : vector<2x2xf32>
      %69 = arith.subf %66, %68 : vector<2x2xf32>
      %70 = arith.mulf %69, %65 : vector<2x2xf32>
      %71 = arith.mulf %70, %70 : vector<2x2xf32>
      %72 = vector.shape_cast %71 : vector<2x2xf32> to vector<1x2x2xf32>
      %cst_53 = arith.constant dense<0.000000e+00> : vector<1xf32>
      %73 = vector.multi_reduction <add>, %72, %cst_53 [1, 2] : vector<1x2x2xf32> to vector<1xf32>
      %74 = vector.shape_cast %73 : vector<1xf32> to vector<1x1x1xf32>
      %75 = vector.extract %74[0, 0, 0] : f32 from vector<1x1x1xf32>
      %cst_54 = arith.constant 4.000000e+00 : f32
      %76 = arith.divf %75, %cst_54 : f32
      %cst_55 = arith.constant 1.000000e+04 : f32
      %77 = arith.mulf %76, %cst_55 : f32
      %c0_56 = arith.constant 0 : index
      %c0_57 = arith.constant 0 : index
      %78 = memref.load %arg3[%c0_56, %c0_57] : memref<1x1xf32, #tpu.memory_space<smem>>
      memref.store %77, %arg3[%c0_56, %c0_57] : memref<1x1xf32, #tpu.memory_space<smem>>
    } else {
    }
    return
  }
  func.func @transform_0(%arg0: i32) -> (i32, i32) {
    %c0_i32 = arith.constant 0 : i32
    %c0_i32_0 = arith.constant 0 : i32
    return %c0_i32, %arg0 : i32, i32
  }
  func.func @transform_1(%arg0: i32) -> (i32, i32) {
    %c0_i32 = arith.constant 0 : i32
    %c0_i32_0 = arith.constant 0 : i32
    return %c0_i32, %arg0 : i32, i32
  }
  func.func @transform_2(%arg0: i32) -> (i32, i32) {
    %c0_i32 = arith.constant 0 : i32
    %c0_i32_0 = arith.constant 0 : i32
    %c0_i32_1 = arith.constant 0 : i32
    return %c0_i32, %c0_i32_0 : i32, i32
  }
}

</mosaic_0001>

<llo_original>
// kernel: diff_loss_norm.1
$region0: #{diff_loss_norm.1}
  #allocation0 [shape = 'u32[]', space=smem, size = 0x4, offset = 0x4, fixed_abs, tag = 'smem constant byte address 0x4 - core index']
  #allocation1 [shape = 'u32[144,128]{1,0:T(1,128)}', space=vmem, size = 0x12000, scoped, tag = 'internal scratch']
  #allocation2 [shape = 'f32[2,1]{1,0:T(2,128)}', space=vmem, size = 0x400, scoped, tag = 'scratch operand']
  #allocation3 [shape = 'f32[2,1]{1,0:T(2,128)}', space=vmem, size = 0x400, scoped, tag = 'scratch operand']
  #allocation4 [shape = 'f32[2,1]{1,0:T(2,128)}', space=vmem, size = 0x400, scoped, tag = 'scratch operand']
  #allocation5 [shape = 'f32[2,1]{1,0:T(2,128)}', space=vmem, size = 0x400, scoped, tag = 'scratch operand']
  #allocation6 [shape = 'f32[2,2]{1,0:T(2,128)}', space=vmem, size = 0x400, scoped, tag = 'scratch operand']
  %s0 = inlined_call_operand.vmem [shape: f32[2,1024], index: 0, kind: input, shape index: {}]
  %s1 = inlined_call_operand.vmem [shape: f32[2,1024], index: 1, kind: input, shape index: {}]
  %s2 = inlined_call_operand.hbm [shape: f32[1,1], index: 2, kind: output, shape index: {}]
  %s3 = sld [smem:[#allocation0]]
  $region26: #{diff_loss_norm.1} parent=0
    _
  %s5 = ssub.s32 1, %s3
  %s6 = scalar_select 0, %s5, %s3
  $region1: #{diff_loss_norm.1} parent=0
    #allocation7 [shape = 'u8[512]{0}', space=smem, size = 0x200, scoped, tag = 'output window, operand 0, single buffered']
    #allocation8 [shape = 's32[1]{0}', space=sflag, size = 0x4, scoped, tag = 'scoped memory for diff_loss_norm.1']
    %7 = vsyncpa [#allocation8], 0
    // Predicated region
    $region2: #{diff_loss_norm.1} parent=1 // pred_check
      _
    $region3: #{diff_loss_norm.1} parent=1 // pred_check_branch
      %9 = sbr.rel (0) target = $region5
    $region4: #{diff_loss_norm.1} parent=1 // pred_region
      _
    $region5: #{diff_loss_norm.1} parent=1 // pred_fallthru
      _
    // Predicated region
    $region6: #{diff_loss_norm.1} parent=1 // pred_check
      _
    $region7: #{diff_loss_norm.1} parent=1 // pred_check_branch
      %11 = sbr.rel (0) target = $region9
    $region8: #{diff_loss_norm.1} parent=1 // pred_region
      _
    $region9: #{diff_loss_norm.1} parent=1 // pred_fallthru
      _
    %p12 = scmp.eq.s32.totalorder 0, 0
    // Predicated region
    $region10: #{diff_loss_norm.1} parent=1 // pred_check
      %p13 = pneg %p12
    $region11: #{diff_loss_norm.1} parent=1 // pred_check_branch
      %15 = sbr.rel (%p13) target = $region13
    $region12: #{diff_loss_norm.1} parent=1 // pred_region
      %vm16 = vcmask 1024
      %17 = vst.msk [vmem:[#allocation2] sm:$0x3] %vm16, 0.0
      %18 = vst.msk [vmem:[#allocation3] sm:$0x3] %vm16, 0.0
      %19 = vst.msk [vmem:[#allocation4] sm:$0x3] %vm16, 0.0
      %20 = vst.msk [vmem:[#allocation5] sm:$0x3] %vm16, 0.0
      %vm21 = vcmask 9216
      %22 = vst.msk [vmem:[#allocation6] sm:$0x3] %vm21, 0.0
    $region13: #{diff_loss_norm.1} parent=1 // pred_fallthru
      _
    %v23 = vld [vmem:[%s0] sm:$0xff]
    %v24 = vld [vmem:[%s0 + $0x8] sm:$0xff]
    %v25 = vld [vmem:[%s1] sm:$0xff]
    %v26 = vld [vmem:[%s1 + $0x8] sm:$0xff]
    %v27 = vld [vmem:[#allocation2] sm:$0x3]
    %v30 = vcombine.high %v23, %v23
    %v32 = vunpack.c.l.s4 1983009808
    %v33 = vunpack.c.0.s8 %v32
    %v34 = vlaneseq
    %v35 = vshrl.u32 %v34, 7
    %v36 = vsub.s32 %v33, %v35
    %v37 = vrot.slane %v23, %v36
    %v39 = vunpack.c.l.s4 1983009808
    %v40 = vunpack.c.0.s8 %v39
    %v41 = vlaneseq
    %v42 = vshrl.u32 %v41, 7
    %v43 = vsub.s32 %v40, %v42
    %v44 = vrot.slane %v30, %v43
    %v45 = vcombine.high %v37, %v37
    %v46 = vcombine.high %v44, %v44
    %v47 = vcombine.high %v24, %v24
    %v49 = vunpack.c.l.s4 1983009808
    %v50 = vunpack.c.0.s8 %v49
    %v51 = vlaneseq
    %v52 = vshrl.u32 %v51, 7
    %v53 = vsub.s32 %v50, %v52
    %v54 = vrot.slane %v24, %v53
    %v56 = vunpack.c.l.s4 1983009808
    %v57 = vunpack.c.0.s8 %v56
    %v58 = vlaneseq
    %v59 = vshrl.u32 %v58, 7
    %v60 = vsub.s32 %v57, %v59
    %v61 = vrot.slane %v47, %v60
    %v62 = vcombine.high %v54, %v54
    %v63 = vcombine.high %v61, %v61
    %vm72 = vcmask 1041408
    %v73 = vsel %vm72, %v37, 0.0
    %v74 = vsel %vm72, %v45, 0.0
    %v75 = vadd.f32 %v73, %v74
    %v76 = vsel %vm72, %v44, 0.0
    %v77 = vadd.f32 %v75, %v76
    %v78 = vsel %vm72, %v46, 0.0
    %v79 = vadd.f32 %v77, %v78
    %v80 = vsel %vm72, %v54, 0.0
    %v81 = vadd.f32 %v79, %v80
    %v82 = vsel %vm72, %v62, 0.0
    %v83 = vadd.f32 %v81, %v82
    %v84 = vsel %vm72, %v61, 0.0
    %v85 = vadd.f32 %v83, %v84
    %v86 = vsel %vm72, %v63, 0.0
    %v87 = vadd.f32 %v85, %v86
    %88 = vadd.xlane.f32.xlu0 %v87
    %v89 = vpop.xlane.xlu0 %88
    %v90 = vadd.f32 %v27, %v89
    %vm91 = vcmask 1024
    %92 = vst.msk [vmem:[#allocation2] sm:$0x3] %vm91, %v90
    %v93 = vld [vmem:[#allocation3] sm:$0x3]
    %v96 = vcombine.high %v25, %v25
    %v98 = vunpack.c.l.s4 1983009808
    %v99 = vunpack.c.0.s8 %v98
    %v100 = vlaneseq
    %v101 = vshrl.u32 %v100, 7
    %v102 = vsub.s32 %v99, %v101
    %v103 = vrot.slane %v25, %v102
    %v105 = vunpack.c.l.s4 1983009808
    %v106 = vunpack.c.0.s8 %v105
    %v107 = vlaneseq
    %v108 = vshrl.u32 %v107, 7
    %v109 = vsub.s32 %v106, %v108
    %v110 = vrot.slane %v96, %v109
    %v111 = vcombine.high %v103, %v103
    %v112 = vcombine.high %v110, %v110
    %v113 = vcombine.high %v26, %v26
    %v115 = vunpack.c.l.s4 1983009808
    %v116 = vunpack.c.0.s8 %v115
    %v117 = vlaneseq
    %v118 = vshrl.u32 %v117, 7
    %v119 = vsub.s32 %v116, %v118
    %v120 = vrot.slane %v26, %v119
    %v122 = vunpack.c.l.s4 1983009808
    %v123 = vunpack.c.0.s8 %v122
    %v124 = vlaneseq
    %v125 = vshrl.u32 %v124, 7
    %v126 = vsub.s32 %v123, %v125
    %v127 = vrot.slane %v113, %v126
    %v128 = vcombine.high %v120, %v120
    %v129 = vcombine.high %v127, %v127
    %v138 = vsel %vm72, %v103, 0.0
    %v139 = vsel %vm72, %v111, 0.0
    %v140 = vadd.f32 %v138, %v139
    %v141 = vsel %vm72, %v110, 0.0
    %v142 = vadd.f32 %v140, %v141
    %v143 = vsel %vm72, %v112, 0.0
    %v144 = vadd.f32 %v142, %v143
    %v145 = vsel %vm72, %v120, 0.0
    %v146 = vadd.f32 %v144, %v145
    %v147 = vsel %vm72, %v128, 0.0
    %v148 = vadd.f32 %v146, %v147
    %v149 = vsel %vm72, %v127, 0.0
    %v150 = vadd.f32 %v148, %v149
    %v151 = vsel %vm72, %v129, 0.0
    %v152 = vadd.f32 %v150, %v151
    %153 = vadd.xlane.f32.xlu0 %v152
    %v154 = vpop.xlane.xlu0 %153
    %v155 = vadd.f32 %v93, %v154
    %156 = vst.msk [vmem:[#allocation3] sm:$0x3] %vm91, %v155
    %v157 = vld [vmem:[#allocation4] sm:$0x3]
    %v158 = vmul.f32 %v23, %v23
    %v159 = vmul.f32 %v24, %v24
    %v162 = vcombine.high %v158, %v158
    %v164 = vunpack.c.l.s4 1983009808
    %v165 = vunpack.c.0.s8 %v164
    %v166 = vlaneseq
    %v167 = vshrl.u32 %v166, 7
    %v168 = vsub.s32 %v165, %v167
    %v169 = vrot.slane %v158, %v168
    %v171 = vunpack.c.l.s4 1983009808
    %v172 = vunpack.c.0.s8 %v171
    %v173 = vlaneseq
    %v174 = vshrl.u32 %v173, 7
    %v175 = vsub.s32 %v172, %v174
    %v176 = vrot.slane %v162, %v175
    %v177 = vcombine.high %v169, %v169
    %v178 = vcombine.high %v176, %v176
    %v179 = vcombine.high %v159, %v159
    %v181 = vunpack.c.l.s4 1983009808
    %v182 = vunpack.c.0.s8 %v181
    %v183 = vlaneseq
    %v184 = vshrl.u32 %v183, 7
    %v185 = vsub.s32 %v182, %v184
    %v186 = vrot.slane %v159, %v185
    %v188 = vunpack.c.l.s4 1983009808
    %v189 = vunpack.c.0.s8 %v188
    %v190 = vlaneseq
    %v191 = vshrl.u32 %v190, 7
    %v192 = vsub.s32 %v189, %v191
    %v193 = vrot.slane %v179, %v192
    %v194 = vcombine.high %v186, %v186
    %v195 = vcombine.high %v193, %v193
    %v204 = vsel %vm72, %v169, 0.0
    %v205 = vsel %vm72, %v177, 0.0
    %v206 = vadd.f32 %v204, %v205
    %v207 = vsel %vm72, %v176, 0.0
    %v208 = vadd.f32 %v206, %v207
    %v209 = vsel %vm72, %v178, 0.0
    %v210 = vadd.f32 %v208, %v209
    %v211 = vsel %vm72, %v186, 0.0
    %v212 = vadd.f32 %v210, %v211
    %v213 = vsel %vm72, %v194, 0.0
    %v214 = vadd.f32 %v212, %v213
    %v215 = vsel %vm72, %v193, 0.0
    %v216 = vadd.f32 %v214, %v215
    %v217 = vsel %vm72, %v195, 0.0
    %v218 = vadd.f32 %v216, %v217
    %219 = vadd.xlane.f32.xlu0 %v218
    %v220 = vpop.xlane.xlu0 %219
    %v221 = vadd.f32 %v157, %v220
    %222 = vst.msk [vmem:[#allocation4] sm:$0x3] %vm91, %v221
    %v223 = vld [vmem:[#allocation5] sm:$0x3]
    %v224 = vmul.f32 %v25, %v25
    %v225 = vmul.f32 %v26, %v26
    %v228 = vcombine.high %v224, %v224
    %v230 = vunpack.c.l.s4 1983009808
    %v231 = vunpack.c.0.s8 %v230
    %v232 = vlaneseq
    %v233 = vshrl.u32 %v232, 7
    %v234 = vsub.s32 %v231, %v233
    %v235 = vrot.slane %v224, %v234
    %v237 = vunpack.c.l.s4 1983009808
    %v238 = vunpack.c.0.s8 %v237
    %v239 = vlaneseq
    %v240 = vshrl.u32 %v239, 7
    %v241 = vsub.s32 %v238, %v240
    %v242 = vrot.slane %v228, %v241
    %v243 = vcombine.high %v235, %v235
    %v244 = vcombine.high %v242, %v242
    %v245 = vcombine.high %v225, %v225
    %v247 = vunpack.c.l.s4 1983009808
    %v248 = vunpack.c.0.s8 %v247
    %v249 = vlaneseq
    %v250 = vshrl.u32 %v249, 7
    %v251 = vsub.s32 %v248, %v250
    %v252 = vrot.slane %v225, %v251
    %v254 = vunpack.c.l.s4 1983009808
    %v255 = vunpack.c.0.s8 %v254
    %v256 = vlaneseq
    %v257 = vshrl.u32 %v256, 7
    %v258 = vsub.s32 %v255, %v257
    %v259 = vrot.slane %v245, %v258
    %v260 = vcombine.high %v252, %v252
    %v261 = vcombine.high %v259, %v259
    %v270 = vsel %vm72, %v235, 0.0
    %v271 = vsel %vm72, %v243, 0.0
    %v272 = vadd.f32 %v270, %v271
    %v273 = vsel %vm72, %v242, 0.0
    %v274 = vadd.f32 %v272, %v273
    %v275 = vsel %vm72, %v244, 0.0
    %v276 = vadd.f32 %v274, %v275
    %v277 = vsel %vm72, %v252, 0.0
    %v278 = vadd.f32 %v276, %v277
    %v279 = vsel %vm72, %v260, 0.0
    %v280 = vadd.f32 %v278, %v279
    %v281 = vsel %vm72, %v259, 0.0
    %v282 = vadd.f32 %v280, %v281
    %v283 = vsel %vm72, %v261, 0.0
    %v284 = vadd.f32 %v282, %v283
    %285 = vadd.xlane.f32.xlu0 %v284
    %v286 = vpop.xlane.xlu0 %285
    %v287 = vadd.f32 %v223, %v286
    %288 = vst.msk [vmem:[#allocation5] sm:$0x3] %vm91, %v287
    %v289 = vld [vmem:[#allocation6] sm:$0x3]
    %290 = vmatprep.subr.mxu0 %v111
    %291 = vmatpush1.xpose.msra.mxu0 %v103
    %292 = vmatprep.subr.mxu0 0.0
    %293 = vmatpush1.xpose.msra.mxu0 0.0
    %294 = vmatprep.subr.mxu0 0.0
    %295 = vmatpush1.xpose.msra.mxu0 0.0
    %296 = vmatprep.subr.mxu0 0.0
    %297 = vmatpush1.xpose.msra.mxu0 0.0
    %298 = vmatprep.subr.mxu0 0.0
    %299 = vmatpush1.xpose.msra.mxu0 0.0
    %300 = vmatprep.subr.mxu0 0.0
    %301 = vmatpush1.xpose.msra.mxu0 0.0
    %302 = vmatprep.subr.mxu0 0.0
    %303 = vmatpush1.xpose.msra.mxu0 0.0
    %304 = vmatprep.subr.mxu0 0.0
    %305 = vmatpush1.xpose.msra.mxu0 0.0
    %306 = vmatprep.subr.mxu0 0.0
    %307 = vmatpush1.xpose.msra.mxu0 0.0
    %308 = vmatprep.subr.mxu0 0.0
    %309 = vmatpush1.xpose.msra.mxu0 0.0
    %310 = vmatprep.subr.mxu0 0.0
    %311 = vmatpush1.xpose.msra.mxu0 0.0
    %312 = vmatprep.subr.mxu0 0.0
    %313 = vmatpush1.xpose.msra.mxu0 0.0
    %314 = vmatprep.subr.mxu0 0.0
    %315 = vmatpush1.xpose.msra.mxu0 0.0
    %316 = vmatprep.subr.mxu0 0.0
    %317 = vmatpush1.xpose.msra.mxu0 0.0
    %318 = vmatprep.subr.mxu0 0.0
    %319 = vmatpush1.xpose.msra.mxu0 0.0
    %320 = vmatprep.subr.mxu0 0.0
    %321 = vmatpush1.xpose.msra.mxu0 0.0
    %322 = vmatprep.subr.mxu0 0.0
    %323 = vmatpush1.xpose.msra.mxu0 0.0
    %324 = vmatprep.subr.mxu0 0.0
    %325 = vmatpush1.xpose.msra.mxu0 0.0
    %326 = vmatprep.subr.mxu0 0.0
    %327 = vmatpush1.xpose.msra.mxu0 0.0
    %328 = vmatprep.subr.mxu0 0.0
    %329 = vmatpush1.xpose.msra.mxu0 0.0
    %330 = vmatprep.subr.mxu0 0.0
    %331 = vmatpush1.xpose.msra.mxu0 0.0
    %332 = vmatprep.subr.mxu0 0.0
    %333 = vmatpush1.xpose.msra.mxu0 0.0
    %334 = vmatprep.subr.mxu0 0.0
    %335 = vmatpush1.xpose.msra.mxu0 0.0
    %336 = vmatprep.subr.mxu0 0.0
    %337 = vmatpush1.xpose.msra.mxu0 0.0
    %338 = vmatprep.subr.mxu0 0.0
    %339 = vmatpush1.xpose.msra.mxu0 0.0
    %340 = vmatprep.subr.mxu0 0.0
    %341 = vmatpush1.xpose.msra.mxu0 0.0
    %342 = vmatprep.subr.mxu0 0.0
    %343 = vmatpush1.xpose.msra.mxu0 0.0
    %344 = vmatprep.subr.mxu0 0.0
    %345 = vmatpush1.xpose.msra.mxu0 0.0
    %346 = vmatprep.subr.mxu0 0.0
    %347 = vmatpush1.xpose.msra.mxu0 0.0
    %348 = vmatprep.subr.mxu0 0.0
    %349 = vmatpush1.xpose.msra.mxu0 0.0
    %350 = vmatprep.subr.mxu0 0.0
    %351 = vmatpush1.xpose.msra.mxu0 0.0
    %352 = vmatprep.subr.mxu0 0.0
    %353 = vmatpush1.xpose.msra.mxu0 0.0
    %354 = vmatprep.mubr.f32.mxu0 %v45
    %355 = vmatmul.mubr.f32.gmra.mrb[0].mxu0 %v37
    %v356 = vpop.f32.mrb[0].mxu0
    %v357 = vadd.f32 0.0, %v356
    %v358 = vpop.f32.mrb[0].mxu0
    %359 = vdwg.mxu0
    %360 = vmatprep.subr.mxu0 %v112
    %361 = vmatpush1.xpose.msra.mxu0 %v110
    %362 = vmatprep.subr.mxu0 0.0
    %363 = vmatpush1.xpose.msra.mxu0 0.0
    %364 = vmatprep.subr.mxu0 0.0
    %365 = vmatpush1.xpose.msra.mxu0 0.0
    %366 = vmatprep.subr.mxu0 0.0
    %367 = vmatpush1.xpose.msra.mxu0 0.0
    %368 = vmatprep.subr.mxu0 0.0
    %369 = vmatpush1.xpose.msra.mxu0 0.0
    %370 = vmatprep.subr.mxu0 0.0
    %371 = vmatpush1.xpose.msra.mxu0 0.0
    %372 = vmatprep.subr.mxu0 0.0
    %373 = vmatpush1.xpose.msra.mxu0 0.0
    %374 = vmatprep.subr.mxu0 0.0
    %375 = vmatpush1.xpose.msra.mxu0 0.0
    %376 = vmatprep.subr.mxu0 0.0
    %377 = vmatpush1.xpose.msra.mxu0 0.0
    %378 = vmatprep.subr.mxu0 0.0
    %379 = vmatpush1.xpose.msra.mxu0 0.0
    %380 = vmatprep.subr.mxu0 0.0
    %381 = vmatpush1.xpose.msra.mxu0 0.0
    %382 = vmatprep.subr.mxu0 0.0
    %383 = vmatpush1.xpose.msra.mxu0 0.0
    %384 = vmatprep.subr.mxu0 0.0
    %385 = vmatpush1.xpose.msra.mxu0 0.0
    %386 = vmatprep.subr.mxu0 0.0
    %387 = vmatpush1.xpose.msra.mxu0 0.0
    %388 = vmatprep.subr.mxu0 0.0
    %389 = vmatpush1.xpose.msra.mxu0 0.0
    %390 = vmatprep.subr.mxu0 0.0
    %391 = vmatpush1.xpose.msra.mxu0 0.0
    %392 = vmatprep.subr.mxu0 0.0
    %393 = vmatpush1.xpose.msra.mxu0 0.0
    %394 = vmatprep.subr.mxu0 0.0
    %395 = vmatpush1.xpose.msra.mxu0 0.0
    %396 = vmatprep.subr.mxu0 0.0
    %397 = vmatpush1.xpose.msra.mxu0 0.0
    %398 = vmatprep.subr.mxu0 0.0
    %399 = vmatpush1.xpose.msra.mxu0 0.0
    %400 = vmatprep.subr.mxu0 0.0
    %401 = vmatpush1.xpose.msra.mxu0 0.0
    %402 = vmatprep.subr.mxu0 0.0
    %403 = vmatpush1.xpose.msra.mxu0 0.0
    %404 = vmatprep.subr.mxu0 0.0
    %405 = vmatpush1.xpose.msra.mxu0 0.0
    %406 = vmatprep.subr.mxu0 0.0
    %407 = vmatpush1.xpose.msra.mxu0 0.0
    %408 = vmatprep.subr.mxu0 0.0
    %409 = vmatpush1.xpose.msra.mxu0 0.0
    %410 = vmatprep.subr.mxu0 0.0
    %411 = vmatpush1.xpose.msra.mxu0 0.0
    %412 = vmatprep.subr.mxu0 0.0
    %413 = vmatpush1.xpose.msra.mxu0 0.0
    %414 = vmatprep.subr.mxu0 0.0
    %415 = vmatpush1.xpose.msra.mxu0 0.0
    %416 = vmatprep.subr.mxu0 0.0
    %417 = vmatpush1.xpose.msra.mxu0 0.0
    %418 = vmatprep.subr.mxu0 0.0
    %419 = vmatpush1.xpose.msra.mxu0 0.0
    %420 = vmatprep.subr.mxu0 0.0
    %421 = vmatpush1.xpose.msra.mxu0 0.0
    %422 = vmatprep.subr.mxu0 0.0
    %423 = vmatpush1.xpose.msra.mxu0 0.0
    %424 = vmatprep.mubr.f32.mxu0 %v46
    %425 = vmatmul.mubr.f32.gmra.mrb[0].mxu0 %v44
    %v426 = vpop.f32.mrb[0].mxu0
    %v427 = vadd.f32 %v357, %v426
    %v428 = vpop.f32.mrb[0].mxu0
    %429 = vdwg.mxu0
    %430 = vmatprep.subr.mxu0 %v128
    %431 = vmatpush1.xpose.msra.mxu0 %v120
    %432 = vmatprep.subr.mxu0 0.0
    %433 = vmatpush1.xpose.msra.mxu0 0.0
    %434 = vmatprep.subr.mxu0 0.0
    %435 = vmatpush1.xpose.msra.mxu0 0.0
    %436 = vmatprep.subr.mxu0 0.0
    %437 = vmatpush1.xpose.msra.mxu0 0.0
    %438 = vmatprep.subr.mxu0 0.0
    %439 = vmatpush1.xpose.msra.mxu0 0.0
    %440 = vmatprep.subr.mxu0 0.0
    %441 = vmatpush1.xpose.msra.mxu0 0.0
    %442 = vmatprep.subr.mxu0 0.0
    %443 = vmatpush1.xpose.msra.mxu0 0.0
    %444 = vmatprep.subr.mxu0 0.0
    %445 = vmatpush1.xpose.msra.mxu0 0.0
    %446 = vmatprep.subr.mxu0 0.0
    %447 = vmatpush1.xpose.msra.mxu0 0.0
    %448 = vmatprep.subr.mxu0 0.0
    %449 = vmatpush1.xpose.msra.mxu0 0.0
    %450 = vmatprep.subr.mxu0 0.0
    %451 = vmatpush1.xpose.msra.mxu0 0.0
    %452 = vmatprep.subr.mxu0 0.0
    %453 = vmatpush1.xpose.msra.mxu0 0.0
    %454 = vmatprep.subr.mxu0 0.0
    %455 = vmatpush1.xpose.msra.mxu0 0.0
    %456 = vmatprep.subr.mxu0 0.0
    %457 = vmatpush1.xpose.msra.mxu0 0.0
    %458 = vmatprep.subr.mxu0 0.0
    %459 = vmatpush1.xpose.msra.mxu0 0.0
    %460 = vmatprep.subr.mxu0 0.0
    %461 = vmatpush1.xpose.msra.mxu0 0.0
    %462 = vmatprep.subr.mxu0 0.0
    %463 = vmatpush1.xpose.msra.mxu0 0.0
    %464 = vmatprep.subr.mxu0 0.0
    %465 = vmatpush1.xpose.msra.mxu0 0.0
    %466 = vmatprep.subr.mxu0 0.0
    %467 = vmatpush1.xpose.msra.mxu0 0.0
    %468 = vmatprep.subr.mxu0 0.0
    %469 = vmatpush1.xpose.msra.mxu0 0.0
    %470 = vmatprep.subr.mxu0 0.0
    %471 = vmatpush1.xpose.msra.mxu0 0.0
    %472 = vmatprep.subr.mxu0 0.0
    %473 = vmatpush1.xpose.msra.mxu0 0.0
    %474 = vmatprep.subr.mxu0 0.0
    %475 = vmatpush1.xpose.msra.mxu0 0.0
    %476 = vmatprep.subr.mxu0 0.0
    %477 = vmatpush1.xpose.msra.mxu0 0.0
    %478 = vmatprep.subr.mxu0 0.0
    %479 = vmatpush1.xpose.msra.mxu0 0.0
    %480 = vmatprep.subr.mxu0 0.0
    %481 = vmatpush1.xpose.msra.mxu0 0.0
    %482 = vmatprep.subr.mxu0 0.0
    %483 = vmatpush1.xpose.msra.mxu0 0.0
    %484 = vmatprep.subr.mxu0 0.0
    %485 = vmatpush1.xpose.msra.mxu0 0.0
    %486 = vmatprep.subr.mxu0 0.0
    %487 = vmatpush1.xpose.msra.mxu0 0.0
    %488 = vmatprep.subr.mxu0 0.0
    %489 = vmatpush1.xpose.msra.mxu0 0.0
    %490 = vmatprep.subr.mxu0 0.0
    %491 = vmatpush1.xpose.msra.mxu0 0.0
    %492 = vmatprep.subr.mxu0 0.0
    %493 = vmatpush1.xpose.msra.mxu0 0.0
    %494 = vmatprep.mubr.f32.mxu0 %v62
    %495 = vmatmul.mubr.f32.gmra.mrb[0].mxu0 %v54
    %v496 = vpop.f32.mrb[0].mxu0
    %v497 = vadd.f32 %v427, %v496
    %v498 = vpop.f32.mrb[0].mxu0
    %499 = vdwg.mxu0
    %500 = vmatprep.subr.mxu0 %v129
    %501 = vmatpush1.xpose.msra.mxu0 %v127
    %502 = vmatprep.subr.mxu0 0.0
    %503 = vmatpush1.xpose.msra.mxu0 0.0
    %504 = vmatprep.subr.mxu0 0.0
    %505 = vmatpush1.xpose.msra.mxu0 0.0
    %506 = vmatprep.subr.mxu0 0.0
    %507 = vmatpush1.xpose.msra.mxu0 0.0
    %508 = vmatprep.subr.mxu0 0.0
    %509 = vmatpush1.xpose.msra.mxu0 0.0
    %510 = vmatprep.subr.mxu0 0.0
    %511 = vmatpush1.xpose.msra.mxu0 0.0
    %512 = vmatprep.subr.mxu0 0.0
    %513 = vmatpush1.xpose.msra.mxu0 0.0
    %514 = vmatprep.subr.mxu0 0.0
    %515 = vmatpush1.xpose.msra.mxu0 0.0
    %516 = vmatprep.subr.mxu0 0.0
    %517 = vmatpush1.xpose.msra.mxu0 0.0
    %518 = vmatprep.subr.mxu0 0.0
    %519 = vmatpush1.xpose.msra.mxu0 0.0
    %520 = vmatprep.subr.mxu0 0.0
    %521 = vmatpush1.xpose.msra.mxu0 0.0
    %522 = vmatprep.subr.mxu0 0.0
    %523 = vmatpush1.xpose.msra.mxu0 0.0
    %524 = vmatprep.subr.mxu0 0.0
    %525 = vmatpush1.xpose.msra.mxu0 0.0
    %526 = vmatprep.subr.mxu0 0.0
    %527 = vmatpush1.xpose.msra.mxu0 0.0
    %528 = vmatprep.subr.mxu0 0.0
    %529 = vmatpush1.xpose.msra.mxu0 0.0
    %530 = vmatprep.subr.mxu0 0.0
    %531 = vmatpush1.xpose.msra.mxu0 0.0
    %532 = vmatprep.subr.mxu0 0.0
    %533 = vmatpush1.xpose.msra.mxu0 0.0
    %534 = vmatprep.subr.mxu0 0.0
    %535 = vmatpush1.xpose.msra.mxu0 0.0
    %536 = vmatprep.subr.mxu0 0.0
    %537 = vmatpush1.xpose.msra.mxu0 0.0
    %538 = vmatprep.subr.mxu0 0.0
    %539 = vmatpush1.xpose.msra.mxu0 0.0
    %540 = vmatprep.subr.mxu0 0.0
    %541 = vmatpush1.xpose.msra.mxu0 0.0
    %542 = vmatprep.subr.mxu0 0.0
    %543 = vmatpush1.xpose.msra.mxu0 0.0
    %544 = vmatprep.subr.mxu0 0.0
    %545 = vmatpush1.xpose.msra.mxu0 0.0
    %546 = vmatprep.subr.mxu0 0.0
    %547 = vmatpush1.xpose.msra.mxu0 0.0
    %548 = vmatprep.subr.mxu0 0.0
    %549 = vmatpush1.xpose.msra.mxu0 0.0
    %550 = vmatprep.subr.mxu0 0.0
    %551 = vmatpush1.xpose.msra.mxu0 0.0
    %552 = vmatprep.subr.mxu0 0.0
    %553 = vmatpush1.xpose.msra.mxu0 0.0
    %554 = vmatprep.subr.mxu0 0.0
    %555 = vmatpush1.xpose.msra.mxu0 0.0
    %556 = vmatprep.subr.mxu0 0.0
    %557 = vmatpush1.xpose.msra.mxu0 0.0
    %558 = vmatprep.subr.mxu0 0.0
    %559 = vmatpush1.xpose.msra.mxu0 0.0
    %560 = vmatprep.subr.mxu0 0.0
    %561 = vmatpush1.xpose.msra.mxu0 0.0
    %562 = vmatprep.subr.mxu0 0.0
    %563 = vmatpush1.xpose.msra.mxu0 0.0
    %564 = vmatprep.mubr.f32.mxu0 %v63
    %565 = vmatmul.mubr.f32.gmra.mrb[0].mxu0 %v61
    %v566 = vpop.f32.mrb[0].mxu0
    %v567 = vadd.f32 %v497, %v566
    %v568 = vpop.f32.mrb[0].mxu0
    %569 = vdwg.mxu0
    %v570 = vadd.f32 %v289, %v567
    %vm571 = vcmask 9216
    %572 = vst.msk [vmem:[#allocation6] sm:$0x3] %vm571, %v570
    // Predicated region
    $region14: #{diff_loss_norm.1} parent=1 // pred_check
      %p573 = pneg %p12
    $region15: #{diff_loss_norm.1} parent=1 // pred_check_branch
      %575 = sbr.rel (%p573) target = $region17
    $region16: #{diff_loss_norm.1} parent=1 // pred_region
      %v576 = vld [vmem:[#allocation2] sm:$0x3]
      %v577 = vmul.f32 %v576, 0.0009765625
      %v578 = vld [vmem:[#allocation3] sm:$0x3]
      %v579 = vmul.f32 %v578, 0.0009765625
      %v580 = vld [vmem:[#allocation4] sm:$0x3]
      %v581 = vmul.f32 %v577, 1024.0
      %v582 = vmul.f32 %v581, %v577
      %v583 = vsub.f32 %v580, %v582
      %v584 = vmax.f32 %v583, 0.0
      %v585 = vld [vmem:[#allocation5] sm:$0x3]
      %v586 = vmul.f32 %v579, 1024.0
      %v587 = vmul.f32 %v586, %v579
      %v588 = vsub.f32 %v585, %v587
      %v589 = vmax.f32 %v588, 0.0
      %v590 = vrsqrt.pop %v584
      %v591 = vmul.f32 %v584, %v590
      %vm592 = vcmp.eq.f32.partialorder %v584, inf
      %v593 = vsel %vm592, %v584, %v591
      %vm594 = vcmp.eq.f32.partialorder %v584, 0.0
      %v595 = vand.u32 %v584, 2147483648
      %v596 = vsel %vm594, %v595, %v593
      %v597 = vadd.f32 %v596, 1e-06
      %v598 = vrcp.pop %v597
      %v599 = vmul.f32 1.0, %v598
      %v600 = vrsqrt.pop %v589
      %v601 = vmul.f32 %v589, %v600
      %vm602 = vcmp.eq.f32.partialorder %v589, inf
      %v603 = vsel %vm602, %v589, %v601
      %vm604 = vcmp.eq.f32.partialorder %v589, 0.0
      %v605 = vand.u32 %v589, 2147483648
      %v606 = vsel %vm604, %v605, %v603
      %v607 = vadd.f32 %v606, 1e-06
      %v608 = vrcp.pop %v607
      %v609 = vmul.f32 1.0, %v608
      %vm610 = vcmask 7168
      %v612 = vsel %vm610, %v577, 0
      %v615 = vsel %vm610, %v579, 0
      %617 = vmatprep.subr.mxu0 0.0
      %618 = vmatpush1.xpose.msra.mxu0 %v615
      %619 = vmatprep.subr.mxu0 0.0
      %620 = vmatpush1.xpose.msra.mxu0 0.0
      %621 = vmatprep.subr.mxu0 0.0
      %622 = vmatpush1.xpose.msra.mxu0 0.0
      %623 = vmatprep.subr.mxu0 0.0
      %624 = vmatpush1.xpose.msra.mxu0 0.0
      %625 = vmatprep.subr.mxu0 0.0
      %626 = vmatpush1.xpose.msra.mxu0 0.0
      %627 = vmatprep.subr.mxu0 0.0
      %628 = vmatpush1.xpose.msra.mxu0 0.0
      %629 = vmatprep.subr.mxu0 0.0
      %630 = vmatpush1.xpose.msra.mxu0 0.0
      %631 = vmatprep.subr.mxu0 0.0
      %632 = vmatpush1.xpose.msra.mxu0 0.0
      %633 = vmatprep.subr.mxu0 0.0
      %634 = vmatpush1.xpose.msra.mxu0 0.0
      %635 = vmatprep.subr.mxu0 0.0
      %636 = vmatpush1.xpose.msra.mxu0 0.0
      %637 = vmatprep.subr.mxu0 0.0
      %638 = vmatpush1.xpose.msra.mxu0 0.0
      %639 = vmatprep.subr.mxu0 0.0
      %640 = vmatpush1.xpose.msra.mxu0 0.0
      %641 = vmatprep.subr.mxu0 0.0
      %642 = vmatpush1.xpose.msra.mxu0 0.0
      %643 = vmatprep.subr.mxu0 0.0
      %644 = vmatpush1.xpose.msra.mxu0 0.0
      %645 = vmatprep.subr.mxu0 0.0
      %646 = vmatpush1.xpose.msra.mxu0 0.0
      %647 = vmatprep.subr.mxu0 0.0
      %648 = vmatpush1.xpose.msra.mxu0 0.0
      %649 = vmatprep.subr.mxu0 0.0
      %650 = vmatpush1.xpose.msra.mxu0 0.0
      %651 = vmatprep.subr.mxu0 0.0
      %652 = vmatpush1.xpose.msra.mxu0 0.0
      %653 = vmatprep.subr.mxu0 0.0
      %654 = vmatpush1.xpose.msra.mxu0 0.0
      %655 = vmatprep.subr.mxu0 0.0
      %656 = vmatpush1.xpose.msra.mxu0 0.0
      %657 = vmatprep.subr.mxu0 0.0
      %658 = vmatpush1.xpose.msra.mxu0 0.0
      %659 = vmatprep.subr.mxu0 0.0
      %660 = vmatpush1.xpose.msra.mxu0 0.0
      %661 = vmatprep.subr.mxu0 0.0
      %662 = vmatpush1.xpose.msra.mxu0 0.0
      %663 = vmatprep.subr.mxu0 0.0
      %664 = vmatpush1.xpose.msra.mxu0 0.0
      %665 = vmatprep.subr.mxu0 0.0
      %666 = vmatpush1.xpose.msra.mxu0 0.0
      %667 = vmatprep.subr.mxu0 0.0
      %668 = vmatpush1.xpose.msra.mxu0 0.0
      %669 = vmatprep.subr.mxu0 0.0
      %670 = vmatpush1.xpose.msra.mxu0 0.0
      %671 = vmatprep.subr.mxu0 0.0
      %672 = vmatpush1.xpose.msra.mxu0 0.0
      %673 = vmatprep.subr.mxu0 0.0
      %674 = vmatpush1.xpose.msra.mxu0 0.0
      %675 = vmatprep.subr.mxu0 0.0
      %676 = vmatpush1.xpose.msra.mxu0 0.0
      %677 = vmatprep.subr.mxu0 0.0
      %678 = vmatpush1.xpose.msra.mxu0 0.0
      %679 = vmatprep.subr.mxu0 0.0
      %680 = vmatpush1.xpose.msra.mxu0 0.0
      %681 = vmatprep.mubr.f32.mxu0 0.0
      %682 = vmatmul.mubr.f32.gmra.mrb[0].mxu0 %v612
      %v683 = vpop.f32.mrb[0].mxu0
      %v684 = vadd.f32 0.0, %v683
      %v685 = vpop.f32.mrb[0].mxu0
      %686 = vdwg.mxu0
      %v688 = vsel %vm610, %v599, 0
      %v691 = vsel %vm610, %v609, 0
      %693 = vmatprep.subr.mxu0 0.0
      %694 = vmatpush1.xpose.msra.mxu0 %v691
      %695 = vmatprep.subr.mxu0 0.0
      %696 = vmatpush1.xpose.msra.mxu0 0.0
      %697 = vmatprep.subr.mxu0 0.0
      %698 = vmatpush1.xpose.msra.mxu0 0.0
      %699 = vmatprep.subr.mxu0 0.0
      %700 = vmatpush1.xpose.msra.mxu0 0.0
      %701 = vmatprep.subr.mxu0 0.0
      %702 = vmatpush1.xpose.msra.mxu0 0.0
      %703 = vmatprep.subr.mxu0 0.0
      %704 = vmatpush1.xpose.msra.mxu0 0.0
      %705 = vmatprep.subr.mxu0 0.0
      %706 = vmatpush1.xpose.msra.mxu0 0.0
      %707 = vmatprep.subr.mxu0 0.0
      %708 = vmatpush1.xpose.msra.mxu0 0.0
      %709 = vmatprep.subr.mxu0 0.0
      %710 = vmatpush1.xpose.msra.mxu0 0.0
      %711 = vmatprep.subr.mxu0 0.0
      %712 = vmatpush1.xpose.msra.mxu0 0.0
      %713 = vmatprep.subr.mxu0 0.0
      %714 = vmatpush1.xpose.msra.mxu0 0.0
      %715 = vmatprep.subr.mxu0 0.0
      %716 = vmatpush1.xpose.msra.mxu0 0.0
      %717 = vmatprep.subr.mxu0 0.0
      %718 = vmatpush1.xpose.msra.mxu0 0.0
      %719 = vmatprep.subr.mxu0 0.0
      %720 = vmatpush1.xpose.msra.mxu0 0.0
      %721 = vmatprep.subr.mxu0 0.0
      %722 = vmatpush1.xpose.msra.mxu0 0.0
      %723 = vmatprep.subr.mxu0 0.0
      %724 = vmatpush1.xpose.msra.mxu0 0.0
      %725 = vmatprep.subr.mxu0 0.0
      %726 = vmatpush1.xpose.msra.mxu0 0.0
      %727 = vmatprep.subr.mxu0 0.0
      %728 = vmatpush1.xpose.msra.mxu0 0.0
      %729 = vmatprep.subr.mxu0 0.0
      %730 = vmatpush1.xpose.msra.mxu0 0.0
      %731 = vmatprep.subr.mxu0 0.0
      %732 = vmatpush1.xpose.msra.mxu0 0.0
      %733 = vmatprep.subr.mxu0 0.0
      %734 = vmatpush1.xpose.msra.mxu0 0.0
      %735 = vmatprep.subr.mxu0 0.0
      %736 = vmatpush1.xpose.msra.mxu0 0.0
      %737 = vmatprep.subr.mxu0 0.0
      %738 = vmatpush1.xpose.msra.mxu0 0.0
      %739 = vmatprep.subr.mxu0 0.0
      %740 = vmatpush1.xpose.msra.mxu0 0.0
      %741 = vmatprep.subr.mxu0 0.0
      %742 = vmatpush1.xpose.msra.mxu0 0.0
      %743 = vmatprep.subr.mxu0 0.0
      %744 = vmatpush1.xpose.msra.mxu0 0.0
      %745 = vmatprep.subr.mxu0 0.0
      %746 = vmatpush1.xpose.msra.mxu0 0.0
      %747 = vmatprep.subr.mxu0 0.0
      %748 = vmatpush1.xpose.msra.mxu0 0.0
      %749 = vmatprep.subr.mxu0 0.0
      %750 = vmatpush1.xpose.msra.mxu0 0.0
      %751 = vmatprep.subr.mxu0 0.0
      %752 = vmatpush1.xpose.msra.mxu0 0.0
      %753 = vmatprep.subr.mxu0 0.0
      %754 = vmatpush1.xpose.msra.mxu0 0.0
      %755 = vmatprep.subr.mxu0 0.0
      %756 = vmatpush1.xpose.msra.mxu0 0.0
      %757 = vmatprep.mubr.f32.mxu0 0.0
      %758 = vmatmul.mubr.f32.gmra.mrb[0].mxu0 %v688
      %v759 = vpop.f32.mrb[0].mxu0
      %v760 = vadd.f32 0.0, %v759
      %v761 = vpop.f32.mrb[0].mxu0
      %762 = vdwg.mxu0
      %v763 = vld [vmem:[#allocation6] sm:$0x3]
      %v764 = vmul.f32 %v684, 1024.0
      %v765 = vsub.f32 %v763, %v764
      %v766 = vmul.f32 %v765, %v760
      %v767 = vmul.f32 %v766, %v766
      %v768 = vsel %vm571, %v767, 0.0
      %769 = vadd.xlane.f32.xlu0 %v768
      %v770 = vpop.xlane.xlu0 %769
      %v771 = vrot.slane %v770, 4
      %v772 = vadd.f32 %v770, %v771
      %v773 = vrot.slane %v772, 2
      %v774 = vadd.f32 %v772, %v773
      %v775 = vrot.slane %v774, 1
      %v776 = vadd.f32 %v774, %v775
      %s777 = vtos %v776
      %v778 = vrcp.pop 4.0
      %s779 = vtos %v778
      %s780 = smul.f32 %s777, %s779
      %s781 = smul.f32 %s780, 10000.0
      %s782 = scalar_lea.smem [#allocation7], 0
      %783 = sst [smem:[%s782]] %s781
    $region17: #{diff_loss_norm.1} parent=1 // pred_fallthru
      _
    // Predicated region
    $region18: #{diff_loss_norm.1} parent=1 // pred_check
      _
    $region19: #{diff_loss_norm.1} parent=1 // pred_check_branch
      %785 = sbr.rel (0) target = $region21
    $region20: #{diff_loss_norm.1} parent=1 // pred_region
      %s787 = ssub.s32 16, 16
      %788 = vsyncadd [#allocation8], %s787
      %791 = dma.smem_to_hbm [#allocation7], 16, %s2, [#allocation8]
    $region21: #{diff_loss_norm.1} parent=1 // pred_fallthru
      _
    // Predicated region
    $region22: #{diff_loss_norm.1} parent=1 // pred_check
      _
    $region23: #{diff_loss_norm.1} parent=1 // pred_check_branch
      %793 = sbr.rel (0) target = $region25
    $region24: #{diff_loss_norm.1} parent=1 // pred_region
      %794 = dma.done [#allocation8], 16
    $region25: #{diff_loss_norm.1} parent=1 // pred_fallthru
      _
    %795 = sfence
    %796 = vsyncpa [#allocation8], 1

</llo_original>
